<compile_context>
chip_gen: v5e
topology: v5e:2x2
jax: 0.10.0
libtpu: 0.0.40
codegen_flags: <defaults>
</compile_context>

<pallas_src>
import jax
import jax.numpy as jnp
from jax.experimental import pallas as pl
from jax.experimental.pallas import tpu as pltpu

IN1, OUT1, OUT2 = 10, 10, 5


def toy_mlp_kernel(x_ref, w1_ref, b1_ref, w2_ref, b2_ref, o_ref):
    # x_ref : [IN1, TB]   (features on sublanes, batch on lanes)
    # w1_ref: [OUT1, IN1] (PyTorch (out, in) layout)
    # b1_ref: [OUT1, 1]
    # w2_ref: [OUT2, OUT1]
    # b2_ref: [OUT2, 1]
    # o_ref : [OUT2, TB]
    h = jnp.dot(w1_ref[...], x_ref[...], preferred_element_type=jnp.float32)
    h = jnp.maximum(h + b1_ref[...], 0.0)           # bias add + ReLU on the VPU
    y = jnp.dot(w2_ref[...], h, preferred_element_type=jnp.float32)
    o_ref[...] = (y + b2_ref[...]).astype(o_ref.dtype)


def _round_up(n, m):
    return ((n + m - 1) // m) * m


def toy_model_forward(x, w1, b1, w2, b2, *, tb=512):
    """x: [B, 10]; w1: [10, 10] (out, in); b1: [10]; w2: [5, 10] (out, in); b2: [5].

    Returns [B, 5], matching nn.Linear semantics: relu(x @ w1.T + b1) @ w2.T + b2.
    """
    B = x.shape[0]
    # Lane axis must be a multiple of 128; cap the tile at the padded batch so
    # small batches don't force a huge block, and pad B up to a tile multiple.
    tb = min(tb, _round_up(B, 128))
    b_pad = _round_up(B, tb)

    # Transpose so batch is the lane (last) axis, pad batch to tile multiple.
    x_t = jnp.transpose(x)                                   # [10, B]
    if b_pad != B:
        x_t = jnp.pad(x_t, ((0, 0), (0, b_pad - B)))         # [10, b_pad]

    b1_col = b1.reshape(OUT1, 1)
    b2_col = b2.reshape(OUT2, 1)

    grid = (pl.cdiv(b_pad, tb),)

    out_t = pl.pallas_call(
        toy_mlp_kernel,
        out_shape=jax.ShapeDtypeStruct((OUT2, b_pad), x.dtype),
        grid=grid,
        in_specs=[
            pl.BlockSpec((IN1, tb), lambda i: (0, i)),       # x^T tile (batch on lanes)
            pl.BlockSpec((OUT1, IN1), lambda i: (0, 0)),     # W1 resident
            pl.BlockSpec((OUT1, 1), lambda i: (0, 0)),       # b1 resident
            pl.BlockSpec((OUT2, OUT1), lambda i: (0, 0)),    # W2 resident
            pl.BlockSpec((OUT2, 1), lambda i: (0, 0)),       # b2 resident
        ],
        out_specs=pl.BlockSpec((OUT2, tb), lambda i: (0, i)),
        compiler_params=pltpu.CompilerParams(
            dimension_semantics=("parallel",),               # v7x: shard batch over 2 TCs
        ),
    )(x_t, w1, b1_col, w2, b2_col)

    return jnp.transpose(out_t[:, :B])                       # [B, 5]


def init_params(key):
    """Deterministic init mimicking nn.Linear's U(-1/sqrt(fan_in), 1/sqrt(fan_in)).

    Weights are stored in PyTorch's (out_features, in_features) layout.
    """
    k1, k2, k3, k4 = jax.random.split(key, 4)
    bound1 = 1.0 / jnp.sqrt(jnp.float32(IN1))
    bound2 = 1.0 / jnp.sqrt(jnp.float32(OUT1))
    w1 = jax.random.uniform(k1, (OUT1, IN1), jnp.float32, -bound1, bound1)
    b1 = jax.random.uniform(k2, (OUT1,), jnp.float32, -bound1, bound1)
    w2 = jax.random.uniform(k3, (OUT2, OUT1), jnp.float32, -bound2, bound2)
    b2 = jax.random.uniform(k4, (OUT2,), jnp.float32, -bound2, bound2)
    return w1, b1, w2, b2


if __name__ == "__main__":
    key = jax.random.PRNGKey(0)
    k_x, k_p = jax.random.split(key)

    B = 8  # small batch (note: for batches this tiny, plain jnp would beat Pallas;
           # the kernel only pays off at large B where the tiled grid pipelines DMAs)
    x = jax.random.normal(k_x, (B, IN1), jnp.float32)
    w1, b1, w2, b2 = init_params(k_p)

    out = toy_model_forward(x, w1, b1, w2, b2)
    out = jax.block_until_ready(out)

    # Reference in plain JAX with nn.Linear semantics (weight is (out, in)).
    ref = jnp.maximum(x @ w1.T + b1, 0.0) @ w2.T + b2
    assert out.shape == (B, OUT2)
    assert jnp.allclose(out, ref, atol=1e-5, rtol=1e-5)

    print("KERNEL_OK")
</pallas_src>

<mosaic_0001>
module attributes {stable_mosaic.version = 11 : i64} {
  func.func @toy_mlp_kernel(%arg0: i32, %arg1: memref<10x128xf32, #tpu.memory_space<vmem>>, %arg2: memref<10x10xf32, #tpu.memory_space<vmem>>, %arg3: memref<10x1xf32, #tpu.memory_space<vmem>>, %arg4: memref<5x10xf32, #tpu.memory_space<vmem>>, %arg5: memref<5x1xf32, #tpu.memory_space<vmem>>, %arg6: memref<5x128xf32, #tpu.memory_space<vmem>>) attributes {dimension_semantics = [#tpu.dimension_semantics<parallel>], iteration_bounds = array<i64: 1>, scalar_prefetch = 0 : i64, scratch_operands = 0 : i64, tpu.core_type = #tpu.core_type<tc>, window_params = [{transform_indices = @transform_0, window_bounds = array<i64: 10, 128>}, {pipeline_mode = #tpu.pipeline_mode<synchronous>, transform_indices = @transform_1, window_bounds = array<i64: 10, 10>}, {pipeline_mode = #tpu.pipeline_mode<synchronous>, transform_indices = @transform_2, window_bounds = array<i64: 10, 1>}, {pipeline_mode = #tpu.pipeline_mode<synchronous>, transform_indices = @transform_3, window_bounds = array<i64: 5, 10>}, {pipeline_mode = #tpu.pipeline_mode<synchronous>, transform_indices = @transform_4, window_bounds = array<i64: 5, 1>}, {transform_indices = @transform_5, window_bounds = array<i64: 5, 128>}]} {
    %c0 = arith.constant 0 : index
    %c0_0 = arith.constant 0 : index
    %0 = vector.load %arg2[%c0, %c0_0] : memref<10x10xf32, #tpu.memory_space<vmem>>, vector<10x10xf32>
    %c0_1 = arith.constant 0 : index
    %c0_2 = arith.constant 0 : index
    %1 = vector.load %arg1[%c0_1, %c0_2] : memref<10x128xf32, #tpu.memory_space<vmem>>, vector<10x128xf32>
    %cst = arith.constant dense<0.000000e+00> : vector<10x128xf32>
    %2 = tpu.matmul %0, %1, %cst {dimension_numbers = #tpu.dot_dimension_numbers<[1], [0], [0], [1], [0, 0, 1, 1], [], []>} : vector<10x10xf32>, vector<10x128xf32>, vector<10x128xf32> -> vector<10x128xf32>
    %c0_3 = arith.constant 0 : index
    %c0_4 = arith.constant 0 : index
    %3 = vector.load %arg3[%c0_3, %c0_4] : memref<10x1xf32, #tpu.memory_space<vmem>>, vector<10x1xf32>
    %4 = vector.broadcast %3 : vector<10x1xf32> to vector<10x128xf32>
    %5 = arith.addf %2, %4 : vector<10x128xf32>
    %cst_5 = arith.constant 0.000000e+00 : f32
    %6 = vector.broadcast %cst_5 : f32 to vector<10x128xf32>
    %7 = arith.maximumf %5, %6 : vector<10x128xf32>
    %c0_6 = arith.constant 0 : index
    %c0_7 = arith.constant 0 : index
    %8 = vector.load %arg4[%c0_6, %c0_7] : memref<5x10xf32, #tpu.memory_space<vmem>>, vector<5x10xf32>
    %cst_8 = arith.constant dense<0.000000e+00> : vector<5x128xf32>
    %9 = tpu.matmul %8, %7, %cst_8 {dimension_numbers = #tpu.dot_dimension_numbers<[1], [0], [0], [1], [0, 0, 1, 1], [], []>} : vector<5x10xf32>, vector<10x128xf32>, vector<5x128xf32> -> vector<5x128xf32>
    %c0_9 = arith.constant 0 : index
    %c0_10 = arith.constant 0 : index
    %10 = vector.load %arg5[%c0_9, %c0_10] : memref<5x1xf32, #tpu.memory_space<vmem>>, vector<5x1xf32>
    %11 = vector.broadcast %10 : vector<5x1xf32> to vector<5x128xf32>
    %12 = arith.addf %9, %11 : vector<5x128xf32>
    %c0_11 = arith.constant 0 : index
    %c0_12 = arith.constant 0 : index
    %13 = vector.load %arg6[%c0_11, %c0_12] : memref<5x128xf32, #tpu.memory_space<vmem>>, vector<5x128xf32>
    tpu.vector_store %arg6[%c0_11, %c0_12], %12 {strides = array<i32>} : memref<5x128xf32, #tpu.memory_space<vmem>>, vector<5x128xf32>,
    return
  }
  func.func @transform_0(%arg0: i32) -> (i32, i32) {
    %c0_i32 = arith.constant 0 : i32
    %c0_i32_0 = arith.constant 0 : i32
    return %c0_i32, %arg0 : i32, i32
  }
  func.func @transform_1(%arg0: i32) -> (i32, i32) {
    %c0_i32 = arith.constant 0 : i32
    %c0_i32_0 = arith.constant 0 : i32
    %c0_i32_1 = arith.constant 0 : i32
    return %c0_i32, %c0_i32_0 : i32, i32
  }
  func.func @transform_2(%arg0: i32) -> (i32, i32) {
    %c0_i32 = arith.constant 0 : i32
    %c0_i32_0 = arith.constant 0 : i32
    %c0_i32_1 = arith.constant 0 : i32
    return %c0_i32, %c0_i32_0 : i32, i32
  }
  func.func @transform_3(%arg0: i32) -> (i32, i32) {
    %c0_i32 = arith.constant 0 : i32
    %c0_i32_0 = arith.constant 0 : i32
    %c0_i32_1 = arith.constant 0 : i32
    return %c0_i32, %c0_i32_0 : i32, i32
  }
  func.func @transform_4(%arg0: i32) -> (i32, i32) {
    %c0_i32 = arith.constant 0 : i32
    %c0_i32_0 = arith.constant 0 : i32
    %c0_i32_1 = arith.constant 0 : i32
    return %c0_i32, %c0_i32_0 : i32, i32
  }
  func.func @transform_5(%arg0: i32) -> (i32, i32) {
    %c0_i32 = arith.constant 0 : i32
    %c0_i32_0 = arith.constant 0 : i32
    return %c0_i32, %arg0 : i32, i32
  }
}

</mosaic_0001>

<llo_original>
// kernel: tpu_custom_call.1
$region0: #{tpu_custom_call.1}
  #allocation0 [shape = 'u32[]', space=smem, size = 0x4, offset = 0x4, fixed_abs, tag = 'smem constant byte address 0x4 - core index']
  #allocation1 [shape = 'u32[72,128]{1,0:T(1,128)}', space=vmem, size = 0x9000, scoped, tag = 'internal scratch']
  %s0 = inlined_call_operand.vmem [shape: f32[10,128], index: 0, kind: input, shape index: {}]
  %s1 = inlined_call_operand.hbm [shape: f32[10,10], index: 1, kind: input, shape index: {}]
  %s2 = inlined_call_operand.vmem [shape: f32[10,1], index: 2, kind: input, shape index: {}]
  %s3 = inlined_call_operand.vmem [shape: f32[5,10], index: 3, kind: input, shape index: {}]
  %s4 = inlined_call_operand.vmem [shape: f32[5,1], index: 4, kind: input, shape index: {}]
  %s5 = inlined_call_operand.hbm [shape: f32[5,128], index: 5, kind: output, shape index: {}]
  %s6 = sld [smem:[#allocation0]]
  $region34: #{tpu_custom_call.1} parent=0
    _
  %s8 = ssub.s32 1, %s6
  %s9 = scalar_select 0, %s8, %s6
  $region1: #{tpu_custom_call.1} parent=0
    #allocation2 [shape = 'u8[8192]{0}', space=vmem, size = 0x2000, scoped, tag = 'input window, operand 1, single buffered']
    #allocation3 [shape = 's32[1]{0}', space=sflag, size = 0x4, scoped, tag = 'scoped memory for tpu_custom_call.1']
    #allocation4 [shape = 's32[1]{0}', space=sflag, size = 0x4, scoped, tag = 'scoped memory for tpu_custom_call.1']
    #allocation5 [shape = 'u8[4096]{0}', space=vmem, size = 0x1000, scoped, tag = 'output window, operand 0, single buffered']
    %10 = vsyncpa [#allocation3], 0
    %11 = vsyncpa [#allocation4], 0
    // Predicated region
    $region2: #{tpu_custom_call.1} parent=1 // pred_check
      _
    $region3: #{tpu_custom_call.1} parent=1 // pred_check_branch
      %13 = sbr.rel (0) target = $region5
    $region4: #{tpu_custom_call.1} parent=1 // pred_region
      _
    $region5: #{tpu_custom_call.1} parent=1 // pred_fallthru
      _
    // Predicated region
    $region6: #{tpu_custom_call.1} parent=1 // pred_check
      _
    $region7: #{tpu_custom_call.1} parent=1 // pred_check_branch
      %15 = sbr.rel (0) target = $region9
    $region8: #{tpu_custom_call.1} parent=1 // pred_region
      %17 = vsyncadd [#allocation3], 0
      %s18 = sshll.u32 %s1, 4
      %s19 = int_to_ptr.hbm [resolvable:$true] %s18
      %s20 = sshll.u32 [#allocation2], 4
      %s21 = int_to_ptr.vmem [resolvable:$true] %s20
      %26 = dma.hbm_to_vmem [thread:$0]  %s19, 256, %s21, [#allocation3], 128, 128, 8
    $region9: #{tpu_custom_call.1} parent=1 // pred_fallthru
      _
    // Predicated region
    $region10: #{tpu_custom_call.1} parent=1 // pred_check
      _
    $region11: #{tpu_custom_call.1} parent=1 // pred_check_branch
      %28 = sbr.rel (0) target = $region13
    $region12: #{tpu_custom_call.1} parent=1 // pred_region
      _
    $region13: #{tpu_custom_call.1} parent=1 // pred_fallthru
      _
    // Predicated region
    $region14: #{tpu_custom_call.1} parent=1 // pred_check
      _
    $region15: #{tpu_custom_call.1} parent=1 // pred_check_branch
      %30 = sbr.rel (0) target = $region17
    $region16: #{tpu_custom_call.1} parent=1 // pred_region
      _
    $region17: #{tpu_custom_call.1} parent=1 // pred_fallthru
      _
    // Predicated region
    $region18: #{tpu_custom_call.1} parent=1 // pred_check
      _
    $region19: #{tpu_custom_call.1} parent=1 // pred_check_branch
      %32 = sbr.rel (0) target = $region21
    $region20: #{tpu_custom_call.1} parent=1 // pred_region
      _
    $region21: #{tpu_custom_call.1} parent=1 // pred_fallthru
      _
    // Predicated region
    $region22: #{tpu_custom_call.1} parent=1 // pred_check
      _
    $region23: #{tpu_custom_call.1} parent=1 // pred_check_branch
      %34 = sbr.rel (0) target = $region25
    $region24: #{tpu_custom_call.1} parent=1 // pred_region
      %36 = dma.done [#allocation3], 256
    $region25: #{tpu_custom_call.1} parent=1 // pred_fallthru
      _
    %v37 = vld [vmem:[#allocation2] sm:$0xff]
    %v38 = vld [vmem:[#allocation2 + $0x8] sm:$0x3]
    %v39 = vld [vmem:[%s0] sm:$0xff]
    %v40 = vld [vmem:[%s0 + $0x8] sm:$0x3]
    %v41 = vld [vmem:[%s2] sm:$0xff]
    %v42 = vld [vmem:[%s2 + $0x8] sm:$0x3]
    %44 = vset.pattern.permute.xlu0 0
    %45 = vperm.xlu0 %44, %v41
    %v46 = vpop.permute.xlu0 %45
    %49 = vset.pattern.permute.xlu0 0
    %50 = vperm.xlu0 %49, %v42
    %v51 = vpop.permute.xlu0 %50
    %vm53 = vcmask 80896
    %v55 = vsel %vm53, %v37, 0
    %v58 = vsel %vm53, %v38, 0
    %vm60 = vcmask 1041408
    %v62 = vsel %vm60, %v40, 0
    %64 = vmatpush.msra.mxu0 0.0
    %65 = vmatpush.msra.mxu0 0.0
    %66 = vmatpush.msra.mxu0 0.0
    %67 = vmatpush.msra.mxu0 0.0
    %68 = vmatpush.msra.mxu0 0.0
    %69 = vmatpush.msra.mxu0 0.0
    %70 = vmatpush.msra.mxu0 0.0
    %71 = vmatpush.msra.mxu0 0.0
    %72 = vmatpush.msra.mxu0 0.0
    %73 = vmatpush.msra.mxu0 0.0
    %74 = vmatpush.msra.mxu0 0.0
    %75 = vmatpush.msra.mxu0 0.0
    %76 = vmatpush.msra.mxu0 0.0
    %77 = vmatpush.msra.mxu0 0.0
    %78 = vmatpush.msra.mxu0 %v62
    %79 = vmatpush.msra.mxu0 %v39
    %80 = vmatmul.f32.gmra.mxu0 %v55
    %v81 = vpop.f32.mrf.mxu0
    %v82 = vadd.f32 %v46, %v81
    %83 = vmatmul.f32.gmra.mxu0 %v58
    %v84 = vpop.f32.mrf.mxu0
    %v85 = vadd.f32 %v51, %v84
    %86 = vdwg.mxu0
    %v87 = vmax.f32 %v82, 0.0
    %v88 = vmax.f32 %v85, 0.0
    %v89 = vld [vmem:[%s3] sm:$0x1f]
    %v90 = vld [vmem:[%s4] sm:$0x1f]
    %92 = vset.pattern.permute.xlu0 0
    %93 = vperm.xlu0 %92, %v90
    %v94 = vpop.permute.xlu0 %93
    %v97 = vsel %vm53, %v89, 0
    %v100 = vsel %vm60, %v88, 0
    %102 = vmatpush.msra.mxu0 0.0
    %103 = vmatpush.msra.mxu0 0.0
    %104 = vmatpush.msra.mxu0 0.0
    %105 = vmatpush.msra.mxu0 0.0
    %106 = vmatpush.msra.mxu0 0.0
    %107 = vmatpush.msra.mxu0 0.0
    %108 = vmatpush.msra.mxu0 0.0
    %109 = vmatpush.msra.mxu0 0.0
    %110 = vmatpush.msra.mxu0 0.0
    %111 = vmatpush.msra.mxu0 0.0
    %112 = vmatpush.msra.mxu0 0.0
    %113 = vmatpush.msra.mxu0 0.0
    %114 = vmatpush.msra.mxu0 0.0
    %115 = vmatpush.msra.mxu0 0.0
    %116 = vmatpush.msra.mxu0 %v100
    %117 = vmatpush.msra.mxu0 %v87
    %118 = vmatmul.f32.gmra.mxu0 %v97
    %v119 = vpop.f32.mrf.mxu0
    %v120 = vadd.f32 %v94, %v119
    %121 = vdwg.mxu0
    %122 = vst [vmem:[#allocation5] sm:$0x1f] %v120
    // Predicated region
    $region26: #{tpu_custom_call.1} parent=1 // pred_check
      _
    $region27: #{tpu_custom_call.1} parent=1 // pred_check_branch
      %124 = sbr.rel (0) target = $region29
    $region28: #{tpu_custom_call.1} parent=1 // pred_region
      %126 = vsyncadd [#allocation4], 0
      %s128 = sshll.u32 [#allocation5], 4
      %s129 = int_to_ptr.vmem [resolvable:$true] %s128
      %s130 = sshll.u32 %s5, 4
      %s131 = int_to_ptr.hbm [resolvable:$true] %s130
      %133 = dma.vmem_to_hbm [thread:$0]  %s129, 128, %s131, [#allocation4]
    $region29: #{tpu_custom_call.1} parent=1 // pred_fallthru
      _
    // Predicated region
    $region30: #{tpu_custom_call.1} parent=1 // pred_check
      _
    $region31: #{tpu_custom_call.1} parent=1 // pred_check_branch
      %135 = sbr.rel (0) target = $region33
    $region32: #{tpu_custom_call.1} parent=1 // pred_region
      %137 = dma.done [#allocation4], 128
    $region33: #{tpu_custom_call.1} parent=1 // pred_fallthru
      _
    %138 = vsyncpa [#allocation3], 1
    %139 = vsyncpa [#allocation4], 1

</llo_original>
